<compile_context>
chip_gen: v7x
topology: tpu7x:2x2x1
jax: 0.10.0
libtpu: 0.0.40
codegen_flags: <defaults>
</compile_context>

<pallas_src>
import functools

import jax
import jax.numpy as jnp
from jax.experimental import pallas as pl
from jax.experimental.pallas import tpu as pltpu


def _round_up(x, m):
    return ((x + m - 1) // m) * m


# ----------------------------- Pallas kernel -------------------------------
def _mlp_kernel(x_ref, w_ref, b_ref, o_ref, *, n_layers, in_rows, out_rows):
    """Fused feature-major MLP forward for one lane-tile of batch columns.

    x_ref : (in_rows, TN)     VMEM   feature-major input tile (in_rows ~ 8)
    w_ref : (L, Wpad, Wpad)   VMEM   PyTorch (out, in) weights, zero-padded;
                                     f32 (exact) or bf16 (MXU operands)
    b_ref : (L, Wpad, 1)      VMEM   zero-padded f32 biases
    o_ref : (out_rows, TN)    VMEM   lane-dense f32 output tile
    """
    mm_dtype = w_ref.dtype  # f32 or bf16; accumulation is always f32

    # Layer 0: only the first `in_rows` weight columns can contribute (the
    # rest are zero padding), so slice them statically — this is what lets the
    # x HBM stream stay at in_rows rows instead of Wpad rows.
    w0 = w_ref[0][:, :in_rows]                                 # (Wpad, in_rows)
    h = jnp.dot(w0, x_ref[...].astype(mm_dtype),
                preferred_element_type=jnp.float32) + b_ref[0]

    for layer in range(1, n_layers):
        a = jnp.tanh(h).astype(mm_dtype)                       # EUP; cast only if bf16
        h = jnp.dot(w_ref[layer], a,
                    preferred_element_type=jnp.float32) + b_ref[layer]

    # Lane-dense (out_rows, TN) store: unmasked vst along the 128-lane axis.
    o_ref[...] = h[:out_rows, :].astype(o_ref.dtype)


def mlp_forward(x_fm, w_packed, b_packed, *, out_rows, tile_n=4096):
    """x_fm: (in_rows, N) feature-major f32 input, in_rows = round_up(input_size, 8)."""
    in_rows, n = x_fm.shape
    n_layers = w_packed.shape[0]

    # Batch tiling: lane-aligned (multiple of 128) columns per grid step.
    #  * Big default tile (4096 cols) amortizes the ~0.35 us per-step overhead;
    #    the double-buffered x tile is only in_rows*tile_n*4 ~ 128 KiB.
    #  * Keep >= 2 "parallel" grid steps once the batch spans two lane tiles so
    #    v7x's two TensorCores (which shard "parallel" axes) both get work.
    n_aligned = _round_up(n, 128)
    if n_aligned >= 2 * 128:
        per_core = _round_up((n_aligned + 1) // 2, 128)
        tile_n = max(128, min(tile_n, per_core))
    else:
        tile_n = min(tile_n, n_aligned)
    n_pad = _round_up(n, tile_n)
    if n_pad != n:
        x_fm = jnp.pad(x_fm, ((0, 0), (0, n_pad - n)))

    kernel = functools.partial(_mlp_kernel, n_layers=n_layers,
                               in_rows=in_rows, out_rows=out_rows)

    out = pl.pallas_call(
        kernel,
        out_shape=jax.ShapeDtypeStruct((out_rows, n_pad), jnp.float32),
        grid_spec=pltpu.PrefetchScalarGridSpec(
            num_scalar_prefetch=0,
            grid=(n_pad // tile_n,),
            in_specs=[
                pl.BlockSpec((in_rows, tile_n), lambda i: (0, i)),
                # Constant-index parameter blocks: fetched once, copy-elided
                # across grid steps (no per-step re-DMA).
                pl.BlockSpec(w_packed.shape, lambda i: (0, 0, 0)),
                pl.BlockSpec(b_packed.shape, lambda i: (0, 0, 0)),
            ],
            out_specs=pl.BlockSpec((out_rows, tile_n), lambda i: (0, i)),
        ),
        compiler_params=pltpu.CompilerParams(
            dimension_semantics=("parallel",)),
    )(x_fm, w_packed, b_packed)

    return out[:, :n]  # drop batch padding


# ------------------------------ Net wrapper ---------------------------------
class NetPallas:
    """JAX/Pallas equivalent of the Torch `Net` module (act = Tanh)."""

    def __init__(self, input_size, neurons_arr, output_size, depth, key):
        dims = [input_size, neurons_arr[0]]
        for i in range(depth):
            dims.append(neurons_arr[i + 1])
        dims.append(output_size)  # layer li: dims[li] -> dims[li+1]

        # PyTorch Linear default init; weights kept in (out, in) convention.
        self.params_raw = []
        for li in range(len(dims) - 1):
            fan_in, fan_out = dims[li], dims[li + 1]
            key, kw, kb = jax.random.split(key, 3)
            bound = 1.0 / float(fan_in) ** 0.5
            w = jax.random.uniform(kw, (fan_out, fan_in), jnp.float32, -bound, bound)
            b = jax.random.uniform(kb, (fan_out,), jnp.float32, -bound, bound)
            self.params_raw.append((w, b))

        self.input_size = input_size
        self.in_pad = _round_up(input_size, 8)      # x rows in HBM (NOT wpad)
        self.out_dim = output_size
        self.n_layers = len(self.params_raw)
        # Common padded width, 8-sublane aligned only (padding to 128 buys no
        # MXU throughput and 4x's VMEM/vreg footprint). Zero padding is exact:
        # tanh(0) == 0 and padded weight columns / bias rows are zero.
        self.wpad = _round_up(max(dims), 8)

        w_packed = jnp.zeros((self.n_layers, self.wpad, self.wpad), jnp.float32)
        b_packed = jnp.zeros((self.n_layers, self.wpad, 1), jnp.float32)
        for li, (w, b) in enumerate(self.params_raw):
            w_packed = w_packed.at[li, : w.shape[0], : w.shape[1]].set(w)
            b_packed = b_packed.at[li, : b.shape[0], 0].set(b)
        self.w_packed = w_packed
        self.b_packed = b_packed
        # Optional bf16 MXU operands (v6e/v7x fast path; keep f32 on v5e).
        # Off by default: validate PINN accuracy before enabling.
        self.w_packed_bf16 = w_packed.astype(jnp.bfloat16)

    def feature_major_input(self, inputs):
        # Each input -> one row of the feature-major (input_size, N) matrix;
        # pad feature rows only to the 8-sublane boundary (NOT wpad), keeping
        # the dominant x HBM stream minimal.
        rows = [jnp.reshape(a, (1, -1)).astype(jnp.float32) for a in inputs]
        x_fm = jnp.concatenate(rows, axis=0)                  # (input_size, N)
        if self.in_pad != x_fm.shape[0]:
            x_fm = jnp.pad(x_fm, ((0, self.in_pad - x_fm.shape[0]), (0, 0)))
        return x_fm

    def __call__(self, inputs, *, tile_n=4096, use_bf16_matmul=False):
        x_fm = self.feature_major_input(inputs)
        w = self.w_packed_bf16 if use_bf16_matmul else self.w_packed
        out_fm = mlp_forward(x_fm, w, self.b_packed,
                             out_rows=self.out_dim, tile_n=tile_n)
        return out_fm.T                                       # (N, output_size)


# Pure-JAX reference for correctness checks.
def _ref_forward(net, inputs):
    cols = [jnp.reshape(a, (-1, 1)).astype(jnp.float32) for a in inputs]
    x = jnp.concatenate(cols, axis=1)
    for li, (w, b) in enumerate(net.params_raw):
        x = x @ w.T + b
        if li < len(net.params_raw) - 1:
            x = jnp.tanh(x)
    return x


# TODO(synk): set_optimizer / derivative (autograd) / load_model / save_model
# are training & I/O utilities with no Pallas-forward equivalent; not ported.

if __name__ == "__main__":
    key = jax.random.PRNGKey(0)
    k_params, k_x, k_t, k_x2, k_t2 = jax.random.split(key, 5)

    # Net(input_size=2, neurons_arr=[32, 32, 32], output_size=1, depth=2, act=Tanh)
    net = NetPallas(input_size=2, neurons_arr=[32, 32, 32],
                    output_size=1, depth=2, key=k_params)

    # --- check 1: small batch (single lane-aligned grid step) ---------------
    N = 64
    x_in = jax.random.normal(k_x, (N,), jnp.float32)
    t_in = jax.random.normal(k_t, (N,), jnp.float32)
    out = jax.block_until_ready(net([x_in, t_in]))
    ref = _ref_forward(net, [x_in, t_in])
    assert out.shape == (N, 1), out.shape
    assert jnp.allclose(out, ref, atol=1e-5, rtol=1e-5), "mismatch vs reference (N=64)"

    # --- check 2: ragged batch, >=2 'parallel' grid steps (v7x: both TCs) ---
    N2 = 300
    x2 = jax.random.normal(k_x2, (N2,), jnp.float32)
    t2 = jax.random.normal(k_t2, (N2,), jnp.float32)
    out2 = jax.block_until_ready(net([x2, t2]))
    ref2 = _ref_forward(net, [x2, t2])
    assert out2.shape == (N2, 1), out2.shape
    assert jnp.allclose(out2, ref2, atol=1e-5, rtol=1e-5), "mismatch vs reference (N=300)"

    # --- check 3: bf16 MXU-operand path compiles & runs (v6e/v7x option) ----
    out3 = jax.block_until_ready(net([x2, t2], use_bf16_matmul=True))
    assert out3.shape == (N2, 1), out3.shape
    assert bool(jnp.all(jnp.isfinite(out3))), "non-finite bf16 output"

    print("KERNEL_OK")
</pallas_src>

<mosaic_0001>
module attributes {stable_mosaic.version = 11 : i64} {
  func.func @_mlp_kernel(%arg0: i32, %arg1: memref<8x128xf32, #tpu.memory_space<vmem>>, %arg2: memref<4x32x32xf32, #tpu.memory_space<vmem>>, %arg3: memref<4x32x1xf32, #tpu.memory_space<vmem>>, %arg4: memref<1x128xf32, #tpu.memory_space<vmem>>) attributes {dimension_semantics = [#tpu.dimension_semantics<parallel>], iteration_bounds = array<i64: 1>, scalar_prefetch = 0 : i64, scratch_operands = 0 : i64, tpu.core_type = #tpu.core_type<tc>, window_params = [{transform_indices = @transform_0, window_bounds = array<i64: 8, 128>}, {pipeline_mode = #tpu.pipeline_mode<synchronous>, transform_indices = @transform_1, window_bounds = array<i64: 4, 32, 32>}, {pipeline_mode = #tpu.pipeline_mode<synchronous>, transform_indices = @transform_2, window_bounds = array<i64: 4, 32, 1>}, {transform_indices = @transform_3, window_bounds = array<i64: 1, 128>}]} {
    %c0 = arith.constant 0 : index
    %c0_0 = arith.constant 0 : index
    %c0_1 = arith.constant 0 : index
    %0 = vector.load %arg2[%c0, %c0_0, %c0_1] : memref<4x32x32xf32, #tpu.memory_space<vmem>>, vector<1x32x32xf32>
    %1 = vector.shape_cast %0 : vector<1x32x32xf32> to vector<32x32xf32>
    %2 = vector.extract_strided_slice %1 {offsets = [0, 0], sizes = [32, 8], strides = [1, 1]} : vector<32x32xf32> to vector<32x8xf32>
    %c0_2 = arith.constant 0 : index
    %c0_3 = arith.constant 0 : index
    %3 = vector.load %arg1[%c0_2, %c0_3] : memref<8x128xf32, #tpu.memory_space<vmem>>, vector<8x128xf32>
    %cst = arith.constant dense<0.000000e+00> : vector<32x128xf32>
    %4 = tpu.matmul %2, %3, %cst {dimension_numbers = #tpu.dot_dimension_numbers<[1], [0], [0], [1], [0, 0, 1, 1], [], []>} : vector<32x8xf32>, vector<8x128xf32>, vector<32x128xf32> -> vector<32x128xf32>
    %c0_4 = arith.constant 0 : index
    %c0_5 = arith.constant 0 : index
    %c0_6 = arith.constant 0 : index
    %5 = vector.load %arg3[%c0_4, %c0_5, %c0_6] : memref<4x32x1xf32, #tpu.memory_space<vmem>>, vector<1x32x1xf32>
    %6 = vector.shape_cast %5 : vector<1x32x1xf32> to vector<32x1xf32>
    %7 = vector.broadcast %6 : vector<32x1xf32> to vector<32x128xf32>
    %8 = arith.addf %4, %7 : vector<32x128xf32>
    %9 = math.tanh %8 : vector<32x128xf32>
    %c1 = arith.constant 1 : index
    %c0_7 = arith.constant 0 : index
    %c0_8 = arith.constant 0 : index
    %10 = vector.load %arg2[%c1, %c0_7, %c0_8] : memref<4x32x32xf32, #tpu.memory_space<vmem>>, vector<1x32x32xf32>
    %11 = vector.shape_cast %10 : vector<1x32x32xf32> to vector<32x32xf32>
    %cst_9 = arith.constant dense<0.000000e+00> : vector<32x128xf32>
    %12 = tpu.matmul %11, %9, %cst_9 {dimension_numbers = #tpu.dot_dimension_numbers<[1], [0], [0], [1], [0, 0, 1, 1], [], []>} : vector<32x32xf32>, vector<32x128xf32>, vector<32x128xf32> -> vector<32x128xf32>
    %c1_10 = arith.constant 1 : index
    %c0_11 = arith.constant 0 : index
    %c0_12 = arith.constant 0 : index
    %13 = vector.load %arg3[%c1_10, %c0_11, %c0_12] : memref<4x32x1xf32, #tpu.memory_space<vmem>>, vector<1x32x1xf32>
    %14 = vector.shape_cast %13 : vector<1x32x1xf32> to vector<32x1xf32>
    %15 = vector.broadcast %14 : vector<32x1xf32> to vector<32x128xf32>
    %16 = arith.addf %12, %15 : vector<32x128xf32>
    %17 = math.tanh %16 : vector<32x128xf32>
    %c2 = arith.constant 2 : index
    %c0_13 = arith.constant 0 : index
    %c0_14 = arith.constant 0 : index
    %18 = vector.load %arg2[%c2, %c0_13, %c0_14] : memref<4x32x32xf32, #tpu.memory_space<vmem>>, vector<1x32x32xf32>
    %19 = vector.shape_cast %18 : vector<1x32x32xf32> to vector<32x32xf32>
    %cst_15 = arith.constant dense<0.000000e+00> : vector<32x128xf32>
    %20 = tpu.matmul %19, %17, %cst_15 {dimension_numbers = #tpu.dot_dimension_numbers<[1], [0], [0], [1], [0, 0, 1, 1], [], []>} : vector<32x32xf32>, vector<32x128xf32>, vector<32x128xf32> -> vector<32x128xf32>
    %c2_16 = arith.constant 2 : index
    %c0_17 = arith.constant 0 : index
    %c0_18 = arith.constant 0 : index
    %21 = vector.load %arg3[%c2_16, %c0_17, %c0_18] : memref<4x32x1xf32, #tpu.memory_space<vmem>>, vector<1x32x1xf32>
    %22 = vector.shape_cast %21 : vector<1x32x1xf32> to vector<32x1xf32>
    %23 = vector.broadcast %22 : vector<32x1xf32> to vector<32x128xf32>
    %24 = arith.addf %20, %23 : vector<32x128xf32>
    %25 = math.tanh %24 : vector<32x128xf32>
    %c3 = arith.constant 3 : index
    %c0_19 = arith.constant 0 : index
    %c0_20 = arith.constant 0 : index
    %26 = vector.load %arg2[%c3, %c0_19, %c0_20] : memref<4x32x32xf32, #tpu.memory_space<vmem>>, vector<1x32x32xf32>
    %27 = vector.shape_cast %26 : vector<1x32x32xf32> to vector<32x32xf32>
    %cst_21 = arith.constant dense<0.000000e+00> : vector<32x128xf32>
    %28 = tpu.matmul %27, %25, %cst_21 {dimension_numbers = #tpu.dot_dimension_numbers<[1], [0], [0], [1], [0, 0, 1, 1], [], []>} : vector<32x32xf32>, vector<32x128xf32>, vector<32x128xf32> -> vector<32x128xf32>
    %c3_22 = arith.constant 3 : index
    %c0_23 = arith.constant 0 : index
    %c0_24 = arith.constant 0 : index
    %29 = vector.load %arg3[%c3_22, %c0_23, %c0_24] : memref<4x32x1xf32, #tpu.memory_space<vmem>>, vector<1x32x1xf32>
    %30 = vector.shape_cast %29 : vector<1x32x1xf32> to vector<32x1xf32>
    %31 = vector.broadcast %30 : vector<32x1xf32> to vector<32x128xf32>
    %32 = arith.addf %28, %31 : vector<32x128xf32>
    %33 = vector.extract_strided_slice %32 {offsets = [0, 0], sizes = [1, 128], strides = [1, 1]} : vector<32x128xf32> to vector<1x128xf32>
    %c0_25 = arith.constant 0 : index
    %c0_26 = arith.constant 0 : index
    %34 = vector.load %arg4[%c0_25, %c0_26] : memref<1x128xf32, #tpu.memory_space<vmem>>, vector<1x128xf32>
    tpu.vector_store %arg4[%c0_25, %c0_26], %33 {strides = array<i32>} : memref<1x128xf32, #tpu.memory_space<vmem>>, vector<1x128xf32>,
    return
  }
  func.func @transform_0(%arg0: i32) -> (i32, i32) {
    %c0_i32 = arith.constant 0 : i32
    %c0_i32_0 = arith.constant 0 : i32
    return %c0_i32, %arg0 : i32, i32
  }
  func.func @transform_1(%arg0: i32) -> (i32, i32, i32) {
    %c0_i32 = arith.constant 0 : i32
    %c0_i32_0 = arith.constant 0 : i32
    %c0_i32_1 = arith.constant 0 : i32
    %c0_i32_2 = arith.constant 0 : i32
    return %c0_i32, %c0_i32_0, %c0_i32_1 : i32, i32, i32
  }
  func.func @transform_2(%arg0: i32) -> (i32, i32, i32) {
    %c0_i32 = arith.constant 0 : i32
    %c0_i32_0 = arith.constant 0 : i32
    %c0_i32_1 = arith.constant 0 : i32
    %c0_i32_2 = arith.constant 0 : i32
    return %c0_i32, %c0_i32_0, %c0_i32_1 : i32, i32, i32
  }
  func.func @transform_3(%arg0: i32) -> (i32, i32) {
    %c0_i32 = arith.constant 0 : i32
    %c0_i32_0 = arith.constant 0 : i32
    return %c0_i32, %arg0 : i32, i32
  }
}

</mosaic_0001>

<llo_original>
// kernel: tpu_custom_call.1
$region0: #{tpu_custom_call.1}
  #allocation0 [shape = 'u32[]', space=smem, size = 0x4, offset = 0x4, fixed_abs, tag = 'smem constant byte address 0x4 - core index']
  #allocation1 [shape = 'u32[144,128]{1,0:T(1,128)}', space=vmem, size = 0x12000, scoped, tag = 'internal scratch']
  %s0 = inlined_call_operand.hbm [shape: f32[8,128], index: 0, kind: input, shape index: {}]
  %s1 = inlined_call_operand.vmem [shape: f32[4,32,32], index: 1, kind: input, shape index: {}]
  %s2 = inlined_call_operand.vmem [shape: f32[4,32,1], index: 2, kind: input, shape index: {}]
  %s3 = inlined_call_operand.hbm [shape: f32[1,128], index: 3, kind: output, shape index: {}]
  %s4 = sld [smem:[#allocation0]]
  $region26: #{tpu_custom_call.1} parent=0
    _
  %s6 = ssub.s32 1, %s4
  %s7 = scalar_select 0, %s6, %s4
  $region1: #{tpu_custom_call.1} parent=0
    #allocation2 [shape = 'u8[4096]{0}', space=vmem, size = 0x1000, scoped, tag = 'input window, operand 0, single buffered']
    #allocation3 [shape = 's32[1]{0}', space=sflag, size = 0x4, scoped, tag = 'scoped memory for tpu_custom_call.1']
    #allocation4 [shape = 's32[1]{0}', space=sflag, size = 0x4, scoped, tag = 'scoped memory for tpu_custom_call.1']
    #allocation5 [shape = 'u8[512]{0}', space=vmem, size = 0x400, scoped, tag = 'output window, operand 0, single buffered']
    %8 = vsyncpa [#allocation3], 0
    %9 = vsyncpa [#allocation4], 0
    // Predicated region
    $region2: #{tpu_custom_call.1} parent=1 // pred_check
      _
    $region3: #{tpu_custom_call.1} parent=1 // pred_check_branch
      %11 = sbr.rel (0) target = $region5
    $region4: #{tpu_custom_call.1} parent=1 // pred_region
      %s13 = ssub.s32 128, 128
      %14 = vsyncadd [#allocation3], %s13
      %s16 = sshll.u32 [#allocation2], 4
      %s17 = int_to_ptr.vmem [resolvable:$true] %s16
      %19 = dma.hbm_to_vmem [thread:$0]  %s0, 128, %s17, [#allocation3]
    $region5: #{tpu_custom_call.1} parent=1 // pred_fallthru
      _
    // Predicated region
    $region6: #{tpu_custom_call.1} parent=1 // pred_check
      _
    $region7: #{tpu_custom_call.1} parent=1 // pred_check_branch
      %21 = sbr.rel (0) target = $region9
    $region8: #{tpu_custom_call.1} parent=1 // pred_region
      _
    $region9: #{tpu_custom_call.1} parent=1 // pred_fallthru
      _
    // Predicated region
    $region10: #{tpu_custom_call.1} parent=1 // pred_check
      _
    $region11: #{tpu_custom_call.1} parent=1 // pred_check_branch
      %23 = sbr.rel (0) target = $region13
    $region12: #{tpu_custom_call.1} parent=1 // pred_region
      _
    $region13: #{tpu_custom_call.1} parent=1 // pred_fallthru
      _
    // Predicated region
    $region14: #{tpu_custom_call.1} parent=1 // pred_check
      _
    $region15: #{tpu_custom_call.1} parent=1 // pred_check_branch
      %25 = sbr.rel (0) target = $region17
    $region16: #{tpu_custom_call.1} parent=1 // pred_region
      %26 = dma.done [#allocation3], 128
    $region17: #{tpu_custom_call.1} parent=1 // pred_fallthru
      _
    %v27 = vld [vmem:[%s1] sm:$0xff]
    %v28 = vld [vmem:[%s1 + $0x8] sm:$0xff]
    %v29 = vld [vmem:[%s1 + $0x10] sm:$0xff]
    %v30 = vld [vmem:[%s1 + $0x18] sm:$0xff]
    %v31 = vld [vmem:[#allocation2] sm:$0xff]
    %v32 = vld [vmem:[%s2] sm:$0xff]
    %v33 = vld [vmem:[%s2 + $0x8] sm:$0xff]
    %v34 = vld [vmem:[%s2 + $0x10] sm:$0xff]
    %v35 = vld [vmem:[%s2 + $0x18] sm:$0xff]
    %37 = vset.pattern.permute.xlu0 0
    %38 = vperm.xlu0 %37, %v32
    %v39 = vpop.permute.xlu0 %38
    %42 = vset.pattern.permute.xlu0 0
    %43 = vperm.xlu0 %42, %v33
    %v44 = vpop.permute.xlu0 %43
    %47 = vset.pattern.permute.xlu0 0
    %48 = vperm.xlu0 %47, %v34
    %v49 = vpop.permute.xlu0 %48
    %52 = vset.pattern.permute.xlu0 0
    %53 = vperm.xlu0 %52, %v35
    %v54 = vpop.permute.xlu0 %53
    %vm56 = vcmask 64512
    %v58 = vsel %vm56, %v27, 0
    %v61 = vsel %vm56, %v28, 0
    %v64 = vsel %vm56, %v29, 0
    %v67 = vsel %vm56, %v30, 0
    %69 = vmatprep.subr.mxu0 0.0
    %70 = vmatpush1.msra.mxu0 %v31
    %71 = vmatprep.subr.mxu0 0.0
    %72 = vmatpush1.msra.mxu0 0.0
    %73 = vmatprep.subr.mxu0 0.0
    %74 = vmatpush1.msra.mxu0 0.0
    %75 = vmatprep.subr.mxu0 0.0
    %76 = vmatpush1.msra.mxu0 0.0
    %77 = vmatprep.subr.mxu0 0.0
    %78 = vmatpush1.msra.mxu0 0.0
    %79 = vmatprep.subr.mxu0 0.0
    %80 = vmatpush1.msra.mxu0 0.0
    %81 = vmatprep.subr.mxu0 0.0
    %82 = vmatpush1.msra.mxu0 0.0
    %83 = vmatprep.subr.mxu0 0.0
    %84 = vmatpush1.msra.mxu0 0.0
    %85 = vmatprep.subr.mxu0 0.0
    %86 = vmatpush1.msra.mxu0 0.0
    %87 = vmatprep.subr.mxu0 0.0
    %88 = vmatpush1.msra.mxu0 0.0
    %89 = vmatprep.subr.mxu0 0.0
    %90 = vmatpush1.msra.mxu0 0.0
    %91 = vmatprep.subr.mxu0 0.0
    %92 = vmatpush1.msra.mxu0 0.0
    %93 = vmatprep.subr.mxu0 0.0
    %94 = vmatpush1.msra.mxu0 0.0
    %95 = vmatprep.subr.mxu0 0.0
    %96 = vmatpush1.msra.mxu0 0.0
    %97 = vmatprep.subr.mxu0 0.0
    %98 = vmatpush1.msra.mxu0 0.0
    %99 = vmatprep.subr.mxu0 0.0
    %100 = vmatpush1.msra.mxu0 0.0
    %101 = vmatprep.subr.mxu0 0.0
    %102 = vmatpush1.msra.mxu0 0.0
    %103 = vmatprep.subr.mxu0 0.0
    %104 = vmatpush1.msra.mxu0 0.0
    %105 = vmatprep.subr.mxu0 0.0
    %106 = vmatpush1.msra.mxu0 0.0
    %107 = vmatprep.subr.mxu0 0.0
    %108 = vmatpush1.msra.mxu0 0.0
    %109 = vmatprep.subr.mxu0 0.0
    %110 = vmatpush1.msra.mxu0 0.0
    %111 = vmatprep.subr.mxu0 0.0
    %112 = vmatpush1.msra.mxu0 0.0
    %113 = vmatprep.subr.mxu0 0.0
    %114 = vmatpush1.msra.mxu0 0.0
    %115 = vmatprep.subr.mxu0 0.0
    %116 = vmatpush1.msra.mxu0 0.0
    %117 = vmatprep.subr.mxu0 0.0
    %118 = vmatpush1.msra.mxu0 0.0
    %119 = vmatprep.subr.mxu0 0.0
    %120 = vmatpush1.msra.mxu0 0.0
    %121 = vmatprep.subr.mxu0 0.0
    %122 = vmatpush1.msra.mxu0 0.0
    %123 = vmatprep.subr.mxu0 0.0
    %124 = vmatpush1.msra.mxu0 0.0
    %125 = vmatprep.subr.mxu0 0.0
    %126 = vmatpush1.msra.mxu0 0.0
    %127 = vmatprep.subr.mxu0 0.0
    %128 = vmatpush1.msra.mxu0 0.0
    %129 = vmatprep.subr.mxu0 0.0
    %130 = vmatpush1.msra.mxu0 0.0
    %131 = vmatprep.subr.mxu0 0.0
    %132 = vmatpush1.msra.mxu0 0.0
    %133 = vmatprep.mubr.f32.mxu0 0.0
    %134 = vmatmul.mubr.f32.gmra.mrb[0].mxu0 %v58
    %v135 = vpop.f32.mrb[0].mxu0
    %v136 = vadd.f32 %v39, %v135
    %v137 = vpop.f32.mrb[0].mxu0
    %138 = vmatprep.mubr.f32.mxu0 0.0
    %139 = vmatmul.mubr.f32.gmra.mrb[0].mxu0 %v61
    %v140 = vpop.f32.mrb[0].mxu0
    %v141 = vadd.f32 %v44, %v140
    %v142 = vpop.f32.mrb[0].mxu0
    %143 = vmatprep.mubr.f32.mxu0 0.0
    %144 = vmatmul.mubr.f32.gmra.mrb[0].mxu0 %v64
    %v145 = vpop.f32.mrb[0].mxu0
    %v146 = vadd.f32 %v49, %v145
    %v147 = vpop.f32.mrb[0].mxu0
    %148 = vmatprep.mubr.f32.mxu0 0.0
    %149 = vmatmul.mubr.f32.gmra.mrb[0].mxu0 %v67
    %v150 = vpop.f32.mrb[0].mxu0
    %v151 = vadd.f32 %v54, %v150
    %v152 = vpop.f32.mrb[0].mxu0
    %153 = vdwg.mxu0
    %v154 = vtanh.pop %v136
    %v155 = vtanh.pop %v141
    %v156 = vtanh.pop %v146
    %v157 = vtanh.pop %v151
    %s158 = scalar_lea.vmem %s1, 32
    %v159 = vld [vmem:[%s158] sm:$0xff]
    %v160 = vld [vmem:[%s158 + $0x8] sm:$0xff]
    %v161 = vld [vmem:[%s158 + $0x10] sm:$0xff]
    %v162 = vld [vmem:[%s158 + $0x18] sm:$0xff]
    %s163 = scalar_lea.vmem %s2, 32
    %v164 = vld [vmem:[%s163] sm:$0xff]
    %v165 = vld [vmem:[%s163 + $0x8] sm:$0xff]
    %v166 = vld [vmem:[%s163 + $0x10] sm:$0xff]
    %v167 = vld [vmem:[%s163 + $0x18] sm:$0xff]
    %169 = vset.pattern.permute.xlu0 0
    %170 = vperm.xlu0 %169, %v164
    %v171 = vpop.permute.xlu0 %170
    %174 = vset.pattern.permute.xlu0 0
    %175 = vperm.xlu0 %174, %v165
    %v176 = vpop.permute.xlu0 %175
    %179 = vset.pattern.permute.xlu0 0
    %180 = vperm.xlu0 %179, %v166
    %v181 = vpop.permute.xlu0 %180
    %184 = vset.pattern.permute.xlu0 0
    %185 = vperm.xlu0 %184, %v167
    %v186 = vpop.permute.xlu0 %185
    %vm188 = vcmask 261120
    %v190 = vsel %vm188, %v159, 0
    %v193 = vsel %vm188, %v160, 0
    %v196 = vsel %vm188, %v161, 0
    %v199 = vsel %vm188, %v162, 0
    %201 = vmatprep.subr.mxu0 0.0
    %202 = vmatpush1.msra.mxu0 %v154
    %203 = vmatprep.subr.mxu0 0.0
    %204 = vmatpush1.msra.mxu0 %v155
    %205 = vmatprep.subr.mxu0 0.0
    %206 = vmatpush1.msra.mxu0 %v156
    %207 = vmatprep.subr.mxu0 0.0
    %208 = vmatpush1.msra.mxu0 %v157
    %209 = vmatprep.subr.mxu0 0.0
    %210 = vmatpush1.msra.mxu0 0.0
    %211 = vmatprep.subr.mxu0 0.0
    %212 = vmatpush1.msra.mxu0 0.0
    %213 = vmatprep.subr.mxu0 0.0
    %214 = vmatpush1.msra.mxu0 0.0
    %215 = vmatprep.subr.mxu0 0.0
    %216 = vmatpush1.msra.mxu0 0.0
    %217 = vmatprep.subr.mxu0 0.0
    %218 = vmatpush1.msra.mxu0 0.0
    %219 = vmatprep.subr.mxu0 0.0
    %220 = vmatpush1.msra.mxu0 0.0
    %221 = vmatprep.subr.mxu0 0.0
    %222 = vmatpush1.msra.mxu0 0.0
    %223 = vmatprep.subr.mxu0 0.0
    %224 = vmatpush1.msra.mxu0 0.0
    %225 = vmatprep.subr.mxu0 0.0
    %226 = vmatpush1.msra.mxu0 0.0
    %227 = vmatprep.subr.mxu0 0.0
    %228 = vmatpush1.msra.mxu0 0.0
    %229 = vmatprep.subr.mxu0 0.0
    %230 = vmatpush1.msra.mxu0 0.0
    %231 = vmatprep.subr.mxu0 0.0
    %232 = vmatpush1.msra.mxu0 0.0
    %233 = vmatprep.subr.mxu0 0.0
    %234 = vmatpush1.msra.mxu0 0.0
    %235 = vmatprep.subr.mxu0 0.0
    %236 = vmatpush1.msra.mxu0 0.0
    %237 = vmatprep.subr.mxu0 0.0
    %238 = vmatpush1.msra.mxu0 0.0
    %239 = vmatprep.subr.mxu0 0.0
    %240 = vmatpush1.msra.mxu0 0.0
    %241 = vmatprep.subr.mxu0 0.0
    %242 = vmatpush1.msra.mxu0 0.0
    %243 = vmatprep.subr.mxu0 0.0
    %244 = vmatpush1.msra.mxu0 0.0
    %245 = vmatprep.subr.mxu0 0.0
    %246 = vmatpush1.msra.mxu0 0.0
    %247 = vmatprep.subr.mxu0 0.0
    %248 = vmatpush1.msra.mxu0 0.0
    %249 = vmatprep.subr.mxu0 0.0
    %250 = vmatpush1.msra.mxu0 0.0
    %251 = vmatprep.subr.mxu0 0.0
    %252 = vmatpush1.msra.mxu0 0.0
    %253 = vmatprep.subr.mxu0 0.0
    %254 = vmatpush1.msra.mxu0 0.0
    %255 = vmatprep.subr.mxu0 0.0
    %256 = vmatpush1.msra.mxu0 0.0
    %257 = vmatprep.subr.mxu0 0.0
    %258 = vmatpush1.msra.mxu0 0.0
    %259 = vmatprep.subr.mxu0 0.0
    %260 = vmatpush1.msra.mxu0 0.0
    %261 = vmatprep.subr.mxu0 0.0
    %262 = vmatpush1.msra.mxu0 0.0
    %263 = vmatprep.subr.mxu0 0.0
    %264 = vmatpush1.msra.mxu0 0.0
    %265 = vmatprep.mubr.f32.mxu0 0.0
    %266 = vmatmul.mubr.f32.gmra.mrb[0].mxu0 %v190
    %v267 = vpop.f32.mrb[0].mxu0
    %v268 = vadd.f32 %v171, %v267
    %v269 = vpop.f32.mrb[0].mxu0
    %270 = vmatprep.mubr.f32.mxu0 0.0
    %271 = vmatmul.mubr.f32.gmra.mrb[0].mxu0 %v193
    %v272 = vpop.f32.mrb[0].mxu0
    %v273 = vadd.f32 %v176, %v272
    %v274 = vpop.f32.mrb[0].mxu0
    %275 = vmatprep.mubr.f32.mxu0 0.0
    %276 = vmatmul.mubr.f32.gmra.mrb[0].mxu0 %v196
    %v277 = vpop.f32.mrb[0].mxu0
    %v278 = vadd.f32 %v181, %v277
    %v279 = vpop.f32.mrb[0].mxu0
    %280 = vmatprep.mubr.f32.mxu0 0.0
    %281 = vmatmul.mubr.f32.gmra.mrb[0].mxu0 %v199
    %v282 = vpop.f32.mrb[0].mxu0
    %v283 = vadd.f32 %v186, %v282
    %v284 = vpop.f32.mrb[0].mxu0
    %285 = vdwg.mxu0
    %v286 = vtanh.pop %v268
    %v287 = vtanh.pop %v273
    %v288 = vtanh.pop %v278
    %v289 = vtanh.pop %v283
    %s290 = scalar_lea.vmem %s1, 64
    %v291 = vld [vmem:[%s290] sm:$0xff]
    %v292 = vld [vmem:[%s290 + $0x8] sm:$0xff]
    %v293 = vld [vmem:[%s290 + $0x10] sm:$0xff]
    %v294 = vld [vmem:[%s290 + $0x18] sm:$0xff]
    %s295 = scalar_lea.vmem %s2, 64
    %v296 = vld [vmem:[%s295] sm:$0xff]
    %v297 = vld [vmem:[%s295 + $0x8] sm:$0xff]
    %v298 = vld [vmem:[%s295 + $0x10] sm:$0xff]
    %v299 = vld [vmem:[%s295 + $0x18] sm:$0xff]
    %301 = vset.pattern.permute.xlu0 0
    %302 = vperm.xlu0 %301, %v296
    %v303 = vpop.permute.xlu0 %302
    %306 = vset.pattern.permute.xlu0 0
    %307 = vperm.xlu0 %306, %v297
    %v308 = vpop.permute.xlu0 %307
    %311 = vset.pattern.permute.xlu0 0
    %312 = vperm.xlu0 %311, %v298
    %v313 = vpop.permute.xlu0 %312
    %316 = vset.pattern.permute.xlu0 0
    %317 = vperm.xlu0 %316, %v299
    %v318 = vpop.permute.xlu0 %317
    %v321 = vsel %vm188, %v291, 0
    %v324 = vsel %vm188, %v292, 0
    %v327 = vsel %vm188, %v293, 0
    %v330 = vsel %vm188, %v294, 0
    %332 = vmatprep.subr.mxu0 0.0
    %333 = vmatpush1.msra.mxu0 %v286
    %334 = vmatprep.subr.mxu0 0.0
    %335 = vmatpush1.msra.mxu0 %v287
    %336 = vmatprep.subr.mxu0 0.0
    %337 = vmatpush1.msra.mxu0 %v288
    %338 = vmatprep.subr.mxu0 0.0
    %339 = vmatpush1.msra.mxu0 %v289
    %340 = vmatprep.subr.mxu0 0.0
    %341 = vmatpush1.msra.mxu0 0.0
    %342 = vmatprep.subr.mxu0 0.0
    %343 = vmatpush1.msra.mxu0 0.0
    %344 = vmatprep.subr.mxu0 0.0
    %345 = vmatpush1.msra.mxu0 0.0
    %346 = vmatprep.subr.mxu0 0.0
    %347 = vmatpush1.msra.mxu0 0.0
    %348 = vmatprep.subr.mxu0 0.0
    %349 = vmatpush1.msra.mxu0 0.0
    %350 = vmatprep.subr.mxu0 0.0
    %351 = vmatpush1.msra.mxu0 0.0
    %352 = vmatprep.subr.mxu0 0.0
    %353 = vmatpush1.msra.mxu0 0.0
    %354 = vmatprep.subr.mxu0 0.0
    %355 = vmatpush1.msra.mxu0 0.0
    %356 = vmatprep.subr.mxu0 0.0
    %357 = vmatpush1.msra.mxu0 0.0
    %358 = vmatprep.subr.mxu0 0.0
    %359 = vmatpush1.msra.mxu0 0.0
    %360 = vmatprep.subr.mxu0 0.0
    %361 = vmatpush1.msra.mxu0 0.0
    %362 = vmatprep.subr.mxu0 0.0
    %363 = vmatpush1.msra.mxu0 0.0
    %364 = vmatprep.subr.mxu0 0.0
    %365 = vmatpush1.msra.mxu0 0.0
    %366 = vmatprep.subr.mxu0 0.0
    %367 = vmatpush1.msra.mxu0 0.0
    %368 = vmatprep.subr.mxu0 0.0
    %369 = vmatpush1.msra.mxu0 0.0
    %370 = vmatprep.subr.mxu0 0.0
    %371 = vmatpush1.msra.mxu0 0.0
    %372 = vmatprep.subr.mxu0 0.0
    %373 = vmatpush1.msra.mxu0 0.0
    %374 = vmatprep.subr.mxu0 0.0
    %375 = vmatpush1.msra.mxu0 0.0
    %376 = vmatprep.subr.mxu0 0.0
    %377 = vmatpush1.msra.mxu0 0.0
    %378 = vmatprep.subr.mxu0 0.0
    %379 = vmatpush1.msra.mxu0 0.0
    %380 = vmatprep.subr.mxu0 0.0
    %381 = vmatpush1.msra.mxu0 0.0
    %382 = vmatprep.subr.mxu0 0.0
    %383 = vmatpush1.msra.mxu0 0.0
    %384 = vmatprep.subr.mxu0 0.0
    %385 = vmatpush1.msra.mxu0 0.0
    %386 = vmatprep.subr.mxu0 0.0
    %387 = vmatpush1.msra.mxu0 0.0
    %388 = vmatprep.subr.mxu0 0.0
    %389 = vmatpush1.msra.mxu0 0.0
    %390 = vmatprep.subr.mxu0 0.0
    %391 = vmatpush1.msra.mxu0 0.0
    %392 = vmatprep.subr.mxu0 0.0
    %393 = vmatpush1.msra.mxu0 0.0
    %394 = vmatprep.subr.mxu0 0.0
    %395 = vmatpush1.msra.mxu0 0.0
    %396 = vmatprep.mubr.f32.mxu0 0.0
    %397 = vmatmul.mubr.f32.gmra.mrb[0].mxu0 %v321
    %v398 = vpop.f32.mrb[0].mxu0
    %v399 = vadd.f32 %v303, %v398
    %v400 = vpop.f32.mrb[0].mxu0
    %401 = vmatprep.mubr.f32.mxu0 0.0
    %402 = vmatmul.mubr.f32.gmra.mrb[0].mxu0 %v324
    %v403 = vpop.f32.mrb[0].mxu0
    %v404 = vadd.f32 %v308, %v403
    %v405 = vpop.f32.mrb[0].mxu0
    %406 = vmatprep.mubr.f32.mxu0 0.0
    %407 = vmatmul.mubr.f32.gmra.mrb[0].mxu0 %v327
    %v408 = vpop.f32.mrb[0].mxu0
    %v409 = vadd.f32 %v313, %v408
    %v410 = vpop.f32.mrb[0].mxu0
    %411 = vmatprep.mubr.f32.mxu0 0.0
    %412 = vmatmul.mubr.f32.gmra.mrb[0].mxu0 %v330
    %v413 = vpop.f32.mrb[0].mxu0
    %v414 = vadd.f32 %v318, %v413
    %v415 = vpop.f32.mrb[0].mxu0
    %416 = vdwg.mxu0
    %v417 = vtanh.pop %v399
    %v418 = vtanh.pop %v404
    %v419 = vtanh.pop %v409
    %v420 = vtanh.pop %v414
    %s421 = scalar_lea.vmem %s1, 96
    %v422 = vld [vmem:[%s421] sm:$0xff]
    %v423 = vld [vmem:[%s421 + $0x8] sm:$0xff]
    %v424 = vld [vmem:[%s421 + $0x10] sm:$0xff]
    %v425 = vld [vmem:[%s421 + $0x18] sm:$0xff]
    %s426 = scalar_lea.vmem %s2, 96
    %v427 = vld [vmem:[%s426] sm:$0xff]
    %v428 = vld [vmem:[%s426 + $0x8] sm:$0xff]
    %v429 = vld [vmem:[%s426 + $0x10] sm:$0xff]
    %v430 = vld [vmem:[%s426 + $0x18] sm:$0xff]
    %432 = vset.pattern.permute.xlu0 0
    %433 = vperm.xlu0 %432, %v427
    %v434 = vpop.permute.xlu0 %433
    %437 = vset.pattern.permute.xlu0 0
    %438 = vperm.xlu0 %437, %v428
    %v439 = vpop.permute.xlu0 %438
    %441 = vset.pattern.permute.xlu0 0
    %442 = vperm.xlu0 %441, %v429
    %v443 = vpop.permute.xlu0 %442
    %445 = vset.pattern.permute.xlu0 0
    %446 = vperm.xlu0 %445, %v430
    %v447 = vpop.permute.xlu0 %446
    %v449 = vsel %vm188, %v422, 0
    %v452 = vsel %vm188, %v423, 0
    %v455 = vsel %vm188, %v424, 0
    %v458 = vsel %vm188, %v425, 0
    %460 = vmatprep.subr.mxu0 0.0
    %461 = vmatpush1.msra.mxu0 %v417
    %462 = vmatprep.subr.mxu0 0.0
    %463 = vmatpush1.msra.mxu0 %v418
    %464 = vmatprep.subr.mxu0 0.0
    %465 = vmatpush1.msra.mxu0 %v419
    %466 = vmatprep.subr.mxu0 0.0
    %467 = vmatpush1.msra.mxu0 %v420
    %468 = vmatprep.subr.mxu0 0.0
    %469 = vmatpush1.msra.mxu0 0.0
    %470 = vmatprep.subr.mxu0 0.0
    %471 = vmatpush1.msra.mxu0 0.0
    %472 = vmatprep.subr.mxu0 0.0
    %473 = vmatpush1.msra.mxu0 0.0
    %474 = vmatprep.subr.mxu0 0.0
    %475 = vmatpush1.msra.mxu0 0.0
    %476 = vmatprep.subr.mxu0 0.0
    %477 = vmatpush1.msra.mxu0 0.0
    %478 = vmatprep.subr.mxu0 0.0
    %479 = vmatpush1.msra.mxu0 0.0
    %480 = vmatprep.subr.mxu0 0.0
    %481 = vmatpush1.msra.mxu0 0.0
    %482 = vmatprep.subr.mxu0 0.0
    %483 = vmatpush1.msra.mxu0 0.0
    %484 = vmatprep.subr.mxu0 0.0
    %485 = vmatpush1.msra.mxu0 0.0
    %486 = vmatprep.subr.mxu0 0.0
    %487 = vmatpush1.msra.mxu0 0.0
    %488 = vmatprep.subr.mxu0 0.0
    %489 = vmatpush1.msra.mxu0 0.0
    %490 = vmatprep.subr.mxu0 0.0
    %491 = vmatpush1.msra.mxu0 0.0
    %492 = vmatprep.subr.mxu0 0.0
    %493 = vmatpush1.msra.mxu0 0.0
    %494 = vmatprep.subr.mxu0 0.0
    %495 = vmatpush1.msra.mxu0 0.0
    %496 = vmatprep.subr.mxu0 0.0
    %497 = vmatpush1.msra.mxu0 0.0
    %498 = vmatprep.subr.mxu0 0.0
    %499 = vmatpush1.msra.mxu0 0.0
    %500 = vmatprep.subr.mxu0 0.0
    %501 = vmatpush1.msra.mxu0 0.0
    %502 = vmatprep.subr.mxu0 0.0
    %503 = vmatpush1.msra.mxu0 0.0
    %504 = vmatprep.subr.mxu0 0.0
    %505 = vmatpush1.msra.mxu0 0.0
    %506 = vmatprep.subr.mxu0 0.0
    %507 = vmatpush1.msra.mxu0 0.0
    %508 = vmatprep.subr.mxu0 0.0
    %509 = vmatpush1.msra.mxu0 0.0
    %510 = vmatprep.subr.mxu0 0.0
    %511 = vmatpush1.msra.mxu0 0.0
    %512 = vmatprep.subr.mxu0 0.0
    %513 = vmatpush1.msra.mxu0 0.0
    %514 = vmatprep.subr.mxu0 0.0
    %515 = vmatpush1.msra.mxu0 0.0
    %516 = vmatprep.subr.mxu0 0.0
    %517 = vmatpush1.msra.mxu0 0.0
    %518 = vmatprep.subr.mxu0 0.0
    %519 = vmatpush1.msra.mxu0 0.0
    %520 = vmatprep.subr.mxu0 0.0
    %521 = vmatpush1.msra.mxu0 0.0
    %522 = vmatprep.subr.mxu0 0.0
    %523 = vmatpush1.msra.mxu0 0.0
    %524 = vmatprep.mubr.f32.mxu0 0.0
    %525 = vmatmul.mubr.f32.gmra.mrb[0].mxu0 %v449
    %v526 = vpop.f32.mrb[0].mxu0
    %v527 = vadd.f32 %v434, %v526
    %v528 = vpop.f32.mrb[0].mxu0
    %529 = vmatprep.mubr.f32.mxu0 0.0
    %530 = vmatmul.mubr.f32.gmra.mrb[0].mxu0 %v452
    %v531 = vpop.f32.mrb[0].mxu0
    %v532 = vpop.f32.mrb[0].mxu0
    %533 = vmatprep.mubr.f32.mxu0 0.0
    %534 = vmatmul.mubr.f32.gmra.mrb[0].mxu0 %v455
    %v535 = vpop.f32.mrb[0].mxu0
    %v536 = vpop.f32.mrb[0].mxu0
    %537 = vmatprep.mubr.f32.mxu0 0.0
    %538 = vmatmul.mubr.f32.gmra.mrb[0].mxu0 %v458
    %v539 = vpop.f32.mrb[0].mxu0
    %v540 = vpop.f32.mrb[0].mxu0
    %541 = vdwg.mxu0
    %542 = vst [vmem:[#allocation5] sm:$0x1] %v527
    // Predicated region
    $region18: #{tpu_custom_call.1} parent=1 // pred_check
      _
    $region19: #{tpu_custom_call.1} parent=1 // pred_check_branch
      %544 = sbr.rel (0) target = $region21
    $region20: #{tpu_custom_call.1} parent=1 // pred_region
      %s546 = ssub.s32 16, 16
      %547 = vsyncadd [#allocation4], %s546
      %s549 = sshll.u32 [#allocation5], 4
      %s550 = int_to_ptr.vmem [resolvable:$true] %s549
      %552 = dma.vmem_to_hbm [thread:$0]  %s550, 16, %s3, [#allocation4]
    $region21: #{tpu_custom_call.1} parent=1 // pred_fallthru
      _
    // Predicated region
    $region22: #{tpu_custom_call.1} parent=1 // pred_check
      _
    $region23: #{tpu_custom_call.1} parent=1 // pred_check_branch
      %554 = sbr.rel (0) target = $region25
    $region24: #{tpu_custom_call.1} parent=1 // pred_region
      %555 = dma.done [#allocation4], 16
    $region25: #{tpu_custom_call.1} parent=1 // pred_fallthru
      _
    %556 = vsyncpa [#allocation3], 1
    %557 = vsyncpa [#allocation4], 1

</llo_original>
